<compile_context>
chip_gen: v7x
topology: tpu7x:2x2x1
jax: 0.10.0
libtpu: 0.0.40
codegen_flags: <defaults>
</compile_context>

<pallas_src>
import functools

import jax
import jax.numpy as jnp
import numpy as np
from jax.experimental import pallas as pl
from jax.experimental.pallas import tpu as pltpu


def _round_up(v, m):
    return (v + m - 1) // m * m


def sine_layer_kernel(x_ref, wt_ref, b_ref, o_ref, *, omega_0):
    # x_ref: (tm, K_pad), wt_ref: (K_pad, tn), b_ref: (1, tn), o_ref: (tm, tn)
    acc = jnp.dot(x_ref[...], wt_ref[...], preferred_element_type=jnp.float32)
    y = jnp.sin((acc + b_ref[...].astype(jnp.float32)) * omega_0)
    o_ref[...] = y.astype(o_ref.dtype)


def sine_layer(x, weight, bias, omega_0=30.0, *, tm=512, tn=512, mxu_dtype=None):
    """y = sin(omega_0 * (x @ weight.T + bias)).

    x: (..., in_feature); weight: (out_feature, in_feature); bias: (out_feature,)
    tm / tn: row and out-feature tiles (sweep 256/512/1024 per chip; tn is
             clamped to a multiple of 128 via feature padding).
    mxu_dtype: optional lower-precision MXU input dtype (e.g. jnp.bfloat16);
               accumulation, bias add, omega scale and sin stay in float32.
    """
    lead = x.shape[:-1]
    K = x.shape[-1]
    x2 = x.reshape(-1, K)
    N = x2.shape[0]
    M = weight.shape[0]
    out_dtype = x.dtype

    compute_dtype = jnp.dtype(mxu_dtype) if mxu_dtype is not None else jnp.dtype(x.dtype)
    bpe = compute_dtype.itemsize
    out_bpe = jnp.dtype(out_dtype).itemsize

    # Lane-dense padding of the feature dims (exact zeros -> no numeric effect).
    K_pad = _round_up(K, 128)
    M_pad = _round_up(M, 128)

    # TODO(synk): in a full SIREN stack, store weights pre-transposed/pre-padded
    # (and pre-cast) at init time so this transpose+pad isn't paid per call, and
    # consider fusing consecutive SineLayers into one kernel (intermediate kept
    # in VMEM) for the small-K layers that are sin/EUP-bound.
    wt = jnp.zeros((K_pad, M_pad), compute_dtype).at[:K, :M].set(
        weight.T.astype(compute_dtype))
    b2 = jnp.zeros((1, M_pad), jnp.float32).at[:, :M].set(bias.astype(jnp.float32))
    xk = x2.astype(compute_dtype)
    if K_pad != K:
        xk = jnp.pad(xk, ((0, 0), (0, K_pad - K)))

    # Tile sizes: as large as the problem allows, (8,128)-aligned.
    tm_eff = max(8, min(tm, _round_up(N, 8)))
    tn_eff = min(tn, M_pad)
    grid_i = pl.cdiv(N, tm_eff)
    grid_j = pl.cdiv(M_pad, tn_eff)

    # Weight / bias specs: when the whole (padded) out_feature fits one tile the
    # block index is constant over the grid, so a single pipeline buffer is
    # enough -> halves weight VMEM (matters on v7x's 64 MiB) at no perf cost.
    w_idx = lambda i, j: (0, j)
    b_idx = lambda i, j: (0, j)
    w_block = (K_pad, tn_eff)
    b_block = (1, tn_eff)
    if grid_j == 1 and K_pad * tn_eff * bpe >= (2 << 20):
        w_spec = pl.BlockSpec(w_block, w_idx, pipeline_mode=pl.Buffered(1))
        b_spec = pl.BlockSpec(b_block, b_idx, pipeline_mode=pl.Buffered(1))
    else:
        w_spec = pl.BlockSpec(w_block, w_idx)
        b_spec = pl.BlockSpec(b_block, b_idx)

    # Explicit VMEM budget (double-buffered x/out + weight/bias) with headroom,
    # capped below v7x's physical limit region.
    vmem_est = 2 * (tm_eff * K_pad * bpe + K_pad * tn_eff * bpe
                    + tn_eff * 4 + tm_eff * tn_eff * out_bpe)
    vmem_limit = int(min(96 * 1024 * 1024, max(32 * 1024 * 1024, 2 * vmem_est)))

    cost = pl.CostEstimate(
        flops=2 * N * K_pad * M_pad,
        transcendentals=N * M_pad,
        bytes_accessed=int(xk.size * bpe + wt.size * bpe + b2.size * 4
                           + N * M_pad * out_bpe),
    )

    kernel = functools.partial(sine_layer_kernel, omega_0=float(omega_0))

    out = pl.pallas_call(
        kernel,
        out_shape=jax.ShapeDtypeStruct((N, M_pad), out_dtype),
        grid_spec=pltpu.PrefetchScalarGridSpec(
            num_scalar_prefetch=0,
            grid=(grid_i, grid_j),
            in_specs=[
                pl.BlockSpec((tm_eff, K_pad), lambda i, j: (i, 0)),
                w_spec,
                b_spec,
            ],
            out_specs=pl.BlockSpec((tm_eff, tn_eff), lambda i, j: (i, j)),
        ),
        compiler_params=pltpu.CompilerParams(
            dimension_semantics=("parallel", "parallel"),
            vmem_limit_bytes=vmem_limit),
        cost_estimate=cost,
    )(xk, wt, b2)

    out = out[:, :M]
    return out.reshape(*lead, M)


def init_sine_layer_params(key, in_feature, out_feature, is_first=False,
                           omega_0=30.0, dtype=jnp.float32):
    """Deterministic init matching SineLayer.init_weights (uniform ranges)."""
    kw, kb = jax.random.split(key)
    if is_first:
        bound_w = 1.0 / in_feature
    else:
        bound_w = np.sqrt(6.0 / in_feature) / omega_0
    weight = jax.random.uniform(kw, (out_feature, in_feature), dtype,
                                minval=-bound_w, maxval=bound_w)
    # nn.Linear default bias init: U(-1/sqrt(in_feature), 1/sqrt(in_feature))
    bound_b = 1.0 / np.sqrt(in_feature)
    bias = jax.random.uniform(kb, (out_feature,), dtype,
                              minval=-bound_b, maxval=bound_b)
    return weight, bias


if __name__ == "__main__":
    key = jax.random.PRNGKey(0)
    k_x, k_p = jax.random.split(key)

    N, in_feature, out_feature = 64, 32, 64
    omega_0 = 30.0

    x = jax.random.normal(k_x, (N, in_feature), jnp.float32)
    weight, bias = init_sine_layer_params(k_p, in_feature, out_feature,
                                          is_first=True, omega_0=omega_0)

    # Reference in plain JAX (f32).
    ref = jnp.sin((x @ weight.T + bias) * omega_0)

    # f32 MXU path.
    out = jax.block_until_ready(sine_layer(x, weight, bias, omega_0=omega_0))
    np.testing.assert_allclose(np.asarray(out), np.asarray(ref),
                               rtol=1e-5, atol=1e-5)

    # bf16 MXU-input path (f32 accumulate + f32 sin), checked against an
    # equivalently bf16-rounded reference.
    xb = x.astype(jnp.bfloat16).astype(jnp.float32)
    wb = weight.astype(jnp.bfloat16).astype(jnp.float32)
    ref_bf16 = jnp.sin((xb @ wb.T + bias) * omega_0)
    out_bf16 = jax.block_until_ready(
        sine_layer(x, weight, bias, omega_0=omega_0, mxu_dtype=jnp.bfloat16))
    np.testing.assert_allclose(np.asarray(out_bf16), np.asarray(ref_bf16),
                               rtol=1e-3, atol=1e-3)

    print("KERNEL_OK")
</pallas_src>

<mosaic_0001>
module attributes {stable_mosaic.version = 11 : i64} {
  func.func @sine_layer_kernel(%arg0: i32, %arg1: i32, %arg2: memref<64x128xf32, #tpu.memory_space<vmem>>, %arg3: memref<128x128xf32, #tpu.memory_space<vmem>>, %arg4: memref<1x128xf32, #tpu.memory_space<vmem>>, %arg5: memref<64x128xf32, #tpu.memory_space<vmem>>) attributes {dimension_semantics = [#tpu.dimension_semantics<parallel>, #tpu.dimension_semantics<parallel>], iteration_bounds = array<i64: 1, 1>, scalar_prefetch = 0 : i64, scratch_operands = 0 : i64, tpu.core_type = #tpu.core_type<tc>, window_params = [{transform_indices = @transform_0, window_bounds = array<i64: 64, 128>}, {transform_indices = @transform_1, window_bounds = array<i64: 128, 128>}, {transform_indices = @transform_2, window_bounds = array<i64: 1, 128>}, {transform_indices = @transform_3, window_bounds = array<i64: 64, 128>}]} {
    %c0 = arith.constant 0 : index
    %c0_0 = arith.constant 0 : index
    %0 = vector.load %arg2[%c0, %c0_0] : memref<64x128xf32, #tpu.memory_space<vmem>>, vector<64x128xf32>
    %c0_1 = arith.constant 0 : index
    %c0_2 = arith.constant 0 : index
    %1 = vector.load %arg3[%c0_1, %c0_2] : memref<128x128xf32, #tpu.memory_space<vmem>>, vector<128x128xf32>
    %cst = arith.constant dense<0.000000e+00> : vector<64x128xf32>
    %2 = tpu.matmul %0, %1, %cst {dimension_numbers = #tpu.dot_dimension_numbers<[1], [0], [0], [1], [0, 0, 1, 1], [], []>} : vector<64x128xf32>, vector<128x128xf32>, vector<64x128xf32> -> vector<64x128xf32>
    %c0_3 = arith.constant 0 : index
    %c0_4 = arith.constant 0 : index
    %3 = vector.load %arg4[%c0_3, %c0_4] : memref<1x128xf32, #tpu.memory_space<vmem>>, vector<1x128xf32>
    %4 = vector.broadcast %3 : vector<1x128xf32> to vector<64x128xf32>
    %5 = arith.addf %2, %4 : vector<64x128xf32>
    %cst_5 = arith.constant 3.000000e+01 : f32
    %6 = vector.broadcast %cst_5 : f32 to vector<64x128xf32>
    %7 = arith.mulf %5, %6 : vector<64x128xf32>
    %8 = math.sin %7 : vector<64x128xf32>
    %c0_6 = arith.constant 0 : index
    %c0_7 = arith.constant 0 : index
    %9 = vector.load %arg5[%c0_6, %c0_7] : memref<64x128xf32, #tpu.memory_space<vmem>>, vector<64x128xf32>
    tpu.vector_store %arg5[%c0_6, %c0_7], %8 {strides = array<i32>} : memref<64x128xf32, #tpu.memory_space<vmem>>, vector<64x128xf32>,
    return
  }
  func.func @transform_0(%arg0: i32, %arg1: i32) -> (i32, i32) {
    %c0_i32 = arith.constant 0 : i32
    %c0_i32_0 = arith.constant 0 : i32
    return %arg0, %c0_i32 : i32, i32
  }
  func.func @transform_1(%arg0: i32, %arg1: i32) -> (i32, i32) {
    %c0_i32 = arith.constant 0 : i32
    %c0_i32_0 = arith.constant 0 : i32
    return %c0_i32, %arg1 : i32, i32
  }
  func.func @transform_2(%arg0: i32, %arg1: i32) -> (i32, i32) {
    %c0_i32 = arith.constant 0 : i32
    %c0_i32_0 = arith.constant 0 : i32
    return %c0_i32, %arg1 : i32, i32
  }
  func.func @transform_3(%arg0: i32, %arg1: i32) -> (i32, i32) {
    %c0_i32 = arith.constant 0 : i32
    return %arg0, %arg1 : i32, i32
  }
}

</mosaic_0001>

<llo_original>
// kernel: tpu_custom_call.1
$region0: #{tpu_custom_call.1}
  #allocation0 [shape = 'u32[]', space=smem, size = 0x4, offset = 0x4, fixed_abs, tag = 'smem constant byte address 0x4 - core index']
  #allocation1 [shape = 'u32[144,128]{1,0:T(1,128)}', space=vmem, size = 0x12000, scoped, tag = 'internal scratch']
  %s0 = inlined_call_operand.hbm [shape: f32[64,128], index: 0, kind: input, shape index: {}]
  %s1 = inlined_call_operand.hbm [shape: f32[128,128], index: 1, kind: input, shape index: {}]
  %s2 = inlined_call_operand.vmem [shape: f32[1,128], index: 2, kind: input, shape index: {}]
  %s3 = inlined_call_operand.hbm [shape: f32[64,128], index: 3, kind: output, shape index: {}]
  %s4 = sld [smem:[#allocation0]]
  $region30: #{tpu_custom_call.1} parent=0
    _
  %s6 = ssub.s32 1, %s4
  %s7 = scalar_select 0, %s6, %s4
  $region1: #{tpu_custom_call.1} parent=0
    #allocation2 [shape = 'u8[32768]{0}', space=vmem, size = 0x8000, scoped, tag = 'input window, operand 0, single buffered']
    #allocation3 [shape = 's32[1]{0}', space=sflag, size = 0x4, scoped, tag = 'scoped memory for tpu_custom_call.1']
    #allocation4 [shape = 's32[1]{0}', space=sflag, size = 0x4, scoped, tag = 'scoped memory for tpu_custom_call.1']
    #allocation5 [shape = 'u8[65536]{0}', space=vmem, size = 0x10000, scoped, tag = 'input window, operand 1, single buffered']
    #allocation6 [shape = 's32[1]{0}', space=sflag, size = 0x4, scoped, tag = 'scoped memory for tpu_custom_call.1']
    #allocation7 [shape = 'u8[32768]{0}', space=vmem, size = 0x8000, scoped, tag = 'output window, operand 0, single buffered']
    %8 = vsyncpa [#allocation3], 0
    %9 = vsyncpa [#allocation6], 0
    %10 = vsyncpa [#allocation4], 0
    // Predicated region
    $region2: #{tpu_custom_call.1} parent=1 // pred_check
      _
    $region3: #{tpu_custom_call.1} parent=1 // pred_check_branch
      %12 = sbr.rel (0) target = $region5
    $region4: #{tpu_custom_call.1} parent=1 // pred_region
      %s14 = ssub.s32 1024, 1024
      %15 = vsyncadd [#allocation3], %s14
      %s16 = sshll.u32 [#allocation2], 4
      %s17 = int_to_ptr.vmem [resolvable:$true] %s16
      %22 = dma.hbm_to_vmem [thread:$0]  %s0, 1024, %s17, [#allocation3], 128, 128, 8
    $region5: #{tpu_custom_call.1} parent=1 // pred_fallthru
      _
    // Predicated region
    $region6: #{tpu_custom_call.1} parent=1 // pred_check
      _
    $region7: #{tpu_custom_call.1} parent=1 // pred_check_branch
      %24 = sbr.rel (0) target = $region9
    $region8: #{tpu_custom_call.1} parent=1 // pred_region
      %s26 = ssub.s32 2048, 2048
      %27 = vsyncadd [#allocation6], %s26
      %s28 = sshll.u32 [#allocation5], 4
      %s29 = int_to_ptr.vmem [resolvable:$true] %s28
      %34 = dma.hbm_to_vmem [thread:$0]  %s1, 2048, %s29, [#allocation6], 128, 128, 8
    $region9: #{tpu_custom_call.1} parent=1 // pred_fallthru
      _
    // Predicated region
    $region10: #{tpu_custom_call.1} parent=1 // pred_check
      _
    $region11: #{tpu_custom_call.1} parent=1 // pred_check_branch
      %36 = sbr.rel (0) target = $region13
    $region12: #{tpu_custom_call.1} parent=1 // pred_region
      _
    $region13: #{tpu_custom_call.1} parent=1 // pred_fallthru
      _
    // Predicated region
    $region14: #{tpu_custom_call.1} parent=1 // pred_check
      _
    $region15: #{tpu_custom_call.1} parent=1 // pred_check_branch
      %38 = sbr.rel (0) target = $region17
    $region16: #{tpu_custom_call.1} parent=1 // pred_region
      %39 = dma.done [#allocation3], 1024
    $region17: #{tpu_custom_call.1} parent=1 // pred_fallthru
      _
    // Predicated region
    $region18: #{tpu_custom_call.1} parent=1 // pred_check
      _
    $region19: #{tpu_custom_call.1} parent=1 // pred_check_branch
      %41 = sbr.rel (0) target = $region21
    $region20: #{tpu_custom_call.1} parent=1 // pred_region
      %42 = dma.done [#allocation6], 2048
    $region21: #{tpu_custom_call.1} parent=1 // pred_fallthru
      _
    %v43 = vld [vmem:[#allocation2] sm:$0xff]
    %v44 = vld [vmem:[#allocation2 + $0x8] sm:$0xff]
    %v45 = vld [vmem:[#allocation2 + $0x10] sm:$0xff]
    %v46 = vld [vmem:[#allocation2 + $0x18] sm:$0xff]
    %v47 = vld [vmem:[#allocation2 + $0x20] sm:$0xff]
    %v48 = vld [vmem:[#allocation2 + $0x28] sm:$0xff]
    %v49 = vld [vmem:[#allocation2 + $0x30] sm:$0xff]
    %v50 = vld [vmem:[#allocation2 + $0x38] sm:$0xff]
    %v51 = vld [vmem:[#allocation5] sm:$0xff]
    %v52 = vld [vmem:[#allocation5 + $0x8] sm:$0xff]
    %v53 = vld [vmem:[#allocation5 + $0x10] sm:$0xff]
    %v54 = vld [vmem:[#allocation5 + $0x18] sm:$0xff]
    %v55 = vld [vmem:[#allocation5 + $0x20] sm:$0xff]
    %v56 = vld [vmem:[#allocation5 + $0x28] sm:$0xff]
    %v57 = vld [vmem:[#allocation5 + $0x30] sm:$0xff]
    %v58 = vld [vmem:[#allocation5 + $0x38] sm:$0xff]
    %v59 = vld [vmem:[#allocation5 + $0x40] sm:$0xff]
    %v60 = vld [vmem:[#allocation5 + $0x48] sm:$0xff]
    %v61 = vld [vmem:[#allocation5 + $0x50] sm:$0xff]
    %v62 = vld [vmem:[#allocation5 + $0x58] sm:$0xff]
    %v63 = vld [vmem:[#allocation5 + $0x60] sm:$0xff]
    %v64 = vld [vmem:[#allocation5 + $0x68] sm:$0xff]
    %v65 = vld [vmem:[#allocation5 + $0x70] sm:$0xff]
    %v66 = vld [vmem:[#allocation5 + $0x78] sm:$0xff]
    %v67 = vld [vmem:[%s2] sm:$0x1]
    %v69 = vlaneseq
    %v70 = vshrl.u32 %v69, 7
    %v71 = vsub.s32 0, %v70
    %v72 = vrot.slane %v67, %v71
    %74 = vmatprep.subr.mxu0 0.0
    %75 = vmatpush1.msra.mxu0 %v51
    %76 = vmatprep.subr.mxu0 0.0
    %77 = vmatpush1.msra.mxu0 %v52
    %78 = vmatprep.subr.mxu0 0.0
    %79 = vmatpush1.msra.mxu0 %v53
    %80 = vmatprep.subr.mxu0 0.0
    %81 = vmatpush1.msra.mxu0 %v54
    %82 = vmatprep.subr.mxu0 0.0
    %83 = vmatpush1.msra.mxu0 %v55
    %84 = vmatprep.subr.mxu0 0.0
    %85 = vmatpush1.msra.mxu0 %v56
    %86 = vmatprep.subr.mxu0 0.0
    %87 = vmatpush1.msra.mxu0 %v57
    %88 = vmatprep.subr.mxu0 0.0
    %89 = vmatpush1.msra.mxu0 %v58
    %90 = vmatprep.subr.mxu0 0.0
    %91 = vmatpush1.msra.mxu0 %v59
    %92 = vmatprep.subr.mxu0 0.0
    %93 = vmatpush1.msra.mxu0 %v60
    %94 = vmatprep.subr.mxu0 0.0
    %95 = vmatpush1.msra.mxu0 %v61
    %96 = vmatprep.subr.mxu0 0.0
    %97 = vmatpush1.msra.mxu0 %v62
    %98 = vmatprep.subr.mxu0 0.0
    %99 = vmatpush1.msra.mxu0 %v63
    %100 = vmatprep.subr.mxu0 0.0
    %101 = vmatpush1.msra.mxu0 %v64
    %102 = vmatprep.subr.mxu0 0.0
    %103 = vmatpush1.msra.mxu0 %v65
    %104 = vmatprep.subr.mxu0 0.0
    %105 = vmatpush1.msra.mxu0 %v66
    %106 = vmatprep.subr.mxu0 0.0
    %107 = vmatpush1.msra.mxu0 0.0
    %108 = vmatprep.subr.mxu0 0.0
    %109 = vmatpush1.msra.mxu0 0.0
    %110 = vmatprep.subr.mxu0 0.0
    %111 = vmatpush1.msra.mxu0 0.0
    %112 = vmatprep.subr.mxu0 0.0
    %113 = vmatpush1.msra.mxu0 0.0
    %114 = vmatprep.subr.mxu0 0.0
    %115 = vmatpush1.msra.mxu0 0.0
    %116 = vmatprep.subr.mxu0 0.0
    %117 = vmatpush1.msra.mxu0 0.0
    %118 = vmatprep.subr.mxu0 0.0
    %119 = vmatpush1.msra.mxu0 0.0
    %120 = vmatprep.subr.mxu0 0.0
    %121 = vmatpush1.msra.mxu0 0.0
    %122 = vmatprep.subr.mxu0 0.0
    %123 = vmatpush1.msra.mxu0 0.0
    %124 = vmatprep.subr.mxu0 0.0
    %125 = vmatpush1.msra.mxu0 0.0
    %126 = vmatprep.subr.mxu0 0.0
    %127 = vmatpush1.msra.mxu0 0.0
    %128 = vmatprep.subr.mxu0 0.0
    %129 = vmatpush1.msra.mxu0 0.0
    %130 = vmatprep.subr.mxu0 0.0
    %131 = vmatpush1.msra.mxu0 0.0
    %132 = vmatprep.subr.mxu0 0.0
    %133 = vmatpush1.msra.mxu0 0.0
    %134 = vmatprep.subr.mxu0 0.0
    %135 = vmatpush1.msra.mxu0 0.0
    %136 = vmatprep.subr.mxu0 0.0
    %137 = vmatpush1.msra.mxu0 0.0
    %138 = vmatprep.mubr.f32.mxu0 0.0
    %139 = vmatmul.mubr.f32.gmra.mrb[0].mxu0 %v43
    %v140 = vpop.f32.mrb[0].mxu0
    %v141 = vadd.f32 %v72, %v140
    %v142 = vpop.f32.mrb[0].mxu0
    %143 = vmatprep.mubr.f32.mxu0 0.0
    %144 = vmatmul.mubr.f32.gmra.mrb[0].mxu0 %v44
    %v145 = vpop.f32.mrb[0].mxu0
    %v146 = vadd.f32 %v72, %v145
    %v147 = vpop.f32.mrb[0].mxu0
    %148 = vmatprep.mubr.f32.mxu0 0.0
    %149 = vmatmul.mubr.f32.gmra.mrb[0].mxu0 %v45
    %v150 = vpop.f32.mrb[0].mxu0
    %v151 = vadd.f32 %v72, %v150
    %v152 = vpop.f32.mrb[0].mxu0
    %153 = vmatprep.mubr.f32.mxu0 0.0
    %154 = vmatmul.mubr.f32.gmra.mrb[0].mxu0 %v46
    %v155 = vpop.f32.mrb[0].mxu0
    %v156 = vadd.f32 %v72, %v155
    %v157 = vpop.f32.mrb[0].mxu0
    %158 = vmatprep.mubr.f32.mxu0 0.0
    %159 = vmatmul.mubr.f32.gmra.mrb[0].mxu0 %v47
    %v160 = vpop.f32.mrb[0].mxu0
    %v161 = vadd.f32 %v72, %v160
    %v162 = vpop.f32.mrb[0].mxu0
    %163 = vmatprep.mubr.f32.mxu0 0.0
    %164 = vmatmul.mubr.f32.gmra.mrb[0].mxu0 %v48
    %v165 = vpop.f32.mrb[0].mxu0
    %v166 = vadd.f32 %v72, %v165
    %v167 = vpop.f32.mrb[0].mxu0
    %168 = vmatprep.mubr.f32.mxu0 0.0
    %169 = vmatmul.mubr.f32.gmra.mrb[0].mxu0 %v49
    %v170 = vpop.f32.mrb[0].mxu0
    %v171 = vadd.f32 %v72, %v170
    %v172 = vpop.f32.mrb[0].mxu0
    %173 = vmatprep.mubr.f32.mxu0 0.0
    %174 = vmatmul.mubr.f32.gmra.mrb[0].mxu0 %v50
    %v175 = vpop.f32.mrb[0].mxu0
    %v176 = vadd.f32 %v72, %v175
    %v177 = vpop.f32.mrb[0].mxu0
    %178 = vdwg.mxu0
    %v179 = vmul.f32 %v141, 30.0
    %v180 = vmul.f32 %v146, 30.0
    %v181 = vmul.f32 %v151, 30.0
    %v182 = vmul.f32 %v156, 30.0
    %v183 = vmul.f32 %v161, 30.0
    %v184 = vmul.f32 %v166, 30.0
    %v185 = vmul.f32 %v171, 30.0
    %v186 = vmul.f32 %v176, 30.0
    %v187 = vand.u32 2147483647, %v179
    %vm188 = vcmp.le.f32.partialorder %v187, 0.7853982
    %vm189 = vcmp.lt.s32.totalorder %v179, 0
    %v190 = vand.u32 %v179, 2139095040
    %v191 = vshrl.u32 %v190, 23
    %v192 = vsub.s32 %v191, 127
    %v193 = vand.u32 2147483647, %v179
    %v194 = vand.u32 %v193, 8388607
    %v195 = vor.u32 %v194, 8388608
    %v196 = vsub.s32 0, %v195
    %v197 = vadd.s32 %v192, 1
    %vm198 = vcmp.gt.s32.totalorder %v197, 0
    %v199 = vsel %vm198, %v197, 0
    %v200 = vshrl.u32 %v199, 5
    %v201 = vand.u32 %v199, 31
    %v202 = vsub.s32 32, %v201
    %v203 = vshrl.u32 683565275, %v202
    %v204 = vshll.u32 683565275, %v201
    %v205 = vshrl.u32 2475754826, %v202
    %v206 = vor.u32 %v204, %v205
    %v207 = vshll.u32 2475754826, %v201
    %v208 = vshrl.u32 2131351028, %v202
    %v209 = vor.u32 %v207, %v208
    %v210 = vshll.u32 2131351028, %v201
    %v211 = vshrl.u32 2102212464, %v202
    %v212 = vor.u32 %v210, %v211
    %v213 = vshll.u32 2102212464, %v201
    %v214 = vshrl.u32 920167782, %v202
    %v215 = vor.u32 %v213, %v214
    %v216 = vshll.u32 920167782, %v201
    %v217 = vshrl.u32 1326507024, %v202
    %v218 = vor.u32 %v216, %v217
    %vm219 = vcmp.lt.s32.totalorder %v200, 1
    %vm220 = vcmp.lt.s32.totalorder %v200, 2
    %vm221 = vcmp.lt.s32.totalorder %v200, 3
    %vm222 = vcmp.lt.s32.totalorder %v200, 4
    %v223 = vsel %vm219, %v203, %v206
    %v224 = vsel %vm222, %v212, 2102212464
    %v225 = vsel %vm221, %v209, %v224
    %v226 = vsel %vm220, %v223, %v225
    %v227 = vsel %vm219, %v206, %v209
    %v228 = vsel %vm222, %v215, 920167782
    %v229 = vsel %vm221, %v212, %v228
    %v230 = vsel %vm220, %v227, %v229
    %v231 = vsel %vm219, %v209, %v212
    %v232 = vsel %vm222, %v218, 1326507024
    %v233 = vsel %vm221, %v215, %v232
    %v234 = vsel %vm220, %v231, %v233
    %v235 = vshll.u32 %v195, 8
    %v236 = vmul.u32.u64.compose %v235, %v234
    %v237 = vextract.low.u32 %v236
    %v238 = vextract.high.u32 %v236
    %v239 = vmul.u32.u64.compose %v235, %v230
    %v240 = vextract.low.u32 %v239
    %v241 = vextract.high.u32 %v239
    %v242 = vmul.u32 %v235, %v226
    %v243 = vadd.s32 %v238, %v240
    %vm244 = vc.u32 %v238, %v240
    %v245 = vadd.s32 %v241, 1
    %v246 = vsel %vm244, %v245, %v241
    %v247 = vadd.s32 %v242, %v246
    %v248 = vadd.s32 %v247, 536870912
    %v249 = vshrl.u32 %v248, 30
    %v250 = vshll.u32 %v249, 30
    %v251 = vsub.s32 %v247, %v250
    %vm252 = vcmp.lt.s32.totalorder %v251, 0
    %v253 = vsub.s32 0, %v251
    %v254 = vsel %vm252, %v253, %v251
    %v255 = vclz %v254
    %v256 = vsub.s32 %v255, 2
    %vm257 = vcmp.gt.s32.totalorder 0, %v256
    %v258 = vsel %vm257, 0, %v256
    %v259 = vsub.s32 32, %v258
    %v260 = vshll.u32 %v251, %v258
    %v261 = vshrl.u32 %v243, %v259
    %v262 = vor.u32 %v260, %v261
    %v263 = vsub.s32 4294967266, %v258
    %v264 = vadd.s32 %v263, 127
    %v265 = vshll.u32 %v264, 23
    %v266 = vor.u32 4788187, %v265
    %v267 = vand.u32 2147483647, %v266
    %v269 = vcvt.s32.f32 %v262
    %v270 = vmul.f32 %v269, %v267
    %v271 = vxor.u32 %v270, 2147483648
    %v272 = vsel %vm189, %v271, %v270
    %v273 = vsub.s32 4, %v249
    %v274 = vsel %vm189, %v273, %v249
    %v275 = vsel %vm188, %v179, %v272
    %v276 = vsel %vm188, 0, %v274
    %v277 = vcosq.f32.pop %v275
    %v278 = vsinq.f32.pop %v275
    %vm279 = vweird.f32 %v179
    %v280 = vadd.s32 %v276, 3
    %v281 = vand.u32 %v280, 3
    %vm282 = vcmp.lt.s32.totalorder %v281, 2
    %vm283 = vcmp.eq.s32.totalorder %v281, 0
    %v284 = vxor.u32 %v278, 2147483648
    %v285 = vsel %vm283, %v277, %v284
    %vm286 = vcmp.eq.s32.totalorder %v281, 2
    %v287 = vxor.u32 %v277, 2147483648
    %v288 = vsel %vm286, %v287, %v278
    %v289 = vsel %vm282, %v285, %v288
    %v290 = vsel %vm279, nan, %v289
    %v291 = vand.u32 2147483647, %v180
    %vm292 = vcmp.le.f32.partialorder %v291, 0.7853982
    %vm293 = vcmp.lt.s32.totalorder %v180, 0
    %v294 = vand.u32 %v180, 2139095040
    %v295 = vshrl.u32 %v294, 23
    %v296 = vsub.s32 %v295, 127
    %v297 = vand.u32 2147483647, %v180
    %v298 = vand.u32 %v297, 8388607
    %v299 = vor.u32 %v298, 8388608
    %v300 = vsub.s32 0, %v299
    %v301 = vadd.s32 %v296, 1
    %vm302 = vcmp.gt.s32.totalorder %v301, 0
    %v303 = vsel %vm302, %v301, 0
    %v304 = vshrl.u32 %v303, 5
    %v305 = vand.u32 %v303, 31
    %v306 = vsub.s32 32, %v305
    %v307 = vshrl.u32 683565275, %v306
    %v308 = vshll.u32 683565275, %v305
    %v309 = vshrl.u32 2475754826, %v306
    %v310 = vor.u32 %v308, %v309
    %v311 = vshll.u32 2475754826, %v305
    %v312 = vshrl.u32 2131351028, %v306
    %v313 = vor.u32 %v311, %v312
    %v314 = vshll.u32 2131351028, %v305
    %v315 = vshrl.u32 2102212464, %v306
    %v316 = vor.u32 %v314, %v315
    %v317 = vshll.u32 2102212464, %v305
    %v318 = vshrl.u32 920167782, %v306
    %v319 = vor.u32 %v317, %v318
    %v320 = vshll.u32 920167782, %v305
    %v321 = vshrl.u32 1326507024, %v306
    %v322 = vor.u32 %v320, %v321
    %vm323 = vcmp.lt.s32.totalorder %v304, 1
    %vm324 = vcmp.lt.s32.totalorder %v304, 2
    %vm325 = vcmp.lt.s32.totalorder %v304, 3
    %vm326 = vcmp.lt.s32.totalorder %v304, 4
    %v327 = vsel %vm323, %v307, %v310
    %v328 = vsel %vm326, %v316, 2102212464
    %v329 = vsel %vm325, %v313, %v328
    %v330 = vsel %vm324, %v327, %v329
    %v331 = vsel %vm323, %v310, %v313
    %v332 = vsel %vm326, %v319, 920167782
    %v333 = vsel %vm325, %v316, %v332
    %v334 = vsel %vm324, %v331, %v333
    %v335 = vsel %vm323, %v313, %v316
    %v336 = vsel %vm326, %v322, 1326507024
    %v337 = vsel %vm325, %v319, %v336
    %v338 = vsel %vm324, %v335, %v337
    %v339 = vshll.u32 %v299, 8
    %v340 = vmul.u32.u64.compose %v339, %v338
    %v341 = vextract.low.u32 %v340
    %v342 = vextract.high.u32 %v340
    %v343 = vmul.u32.u64.compose %v339, %v334
    %v344 = vextract.low.u32 %v343
    %v345 = vextract.high.u32 %v343
    %v346 = vmul.u32 %v339, %v330
    %v347 = vadd.s32 %v342, %v344
    %vm348 = vc.u32 %v342, %v344
    %v349 = vadd.s32 %v345, 1
    %v350 = vsel %vm348, %v349, %v345
    %v351 = vadd.s32 %v346, %v350
    %v352 = vadd.s32 %v351, 536870912
    %v353 = vshrl.u32 %v352, 30
    %v354 = vshll.u32 %v353, 30
    %v355 = vsub.s32 %v351, %v354
    %vm356 = vcmp.lt.s32.totalorder %v355, 0
    %v357 = vsub.s32 0, %v355
    %v358 = vsel %vm356, %v357, %v355
    %v359 = vclz %v358
    %v360 = vsub.s32 %v359, 2
    %vm361 = vcmp.gt.s32.totalorder 0, %v360
    %v362 = vsel %vm361, 0, %v360
    %v363 = vsub.s32 32, %v362
    %v364 = vshll.u32 %v355, %v362
    %v365 = vshrl.u32 %v347, %v363
    %v366 = vor.u32 %v364, %v365
    %v367 = vsub.s32 4294967266, %v362
    %v368 = vadd.s32 %v367, 127
    %v369 = vshll.u32 %v368, 23
    %v370 = vor.u32 4788187, %v369
    %v371 = vand.u32 2147483647, %v370
    %v373 = vcvt.s32.f32 %v366
    %v374 = vmul.f32 %v373, %v371
    %v375 = vxor.u32 %v374, 2147483648
    %v376 = vsel %vm293, %v375, %v374
    %v377 = vsub.s32 4, %v353
    %v378 = vsel %vm293, %v377, %v353
    %v379 = vsel %vm292, %v180, %v376
    %v380 = vsel %vm292, 0, %v378
    %v381 = vcosq.f32.pop %v379
    %v382 = vsinq.f32.pop %v379
    %vm383 = vweird.f32 %v180
    %v384 = vadd.s32 %v380, 3
    %v385 = vand.u32 %v384, 3
    %vm386 = vcmp.lt.s32.totalorder %v385, 2
    %vm387 = vcmp.eq.s32.totalorder %v385, 0
    %v388 = vxor.u32 %v382, 2147483648
    %v389 = vsel %vm387, %v381, %v388
    %vm390 = vcmp.eq.s32.totalorder %v385, 2
    %v391 = vxor.u32 %v381, 2147483648
    %v392 = vsel %vm390, %v391, %v382
    %v393 = vsel %vm386, %v389, %v392
    %v394 = vsel %vm383, nan, %v393
    %v395 = vand.u32 2147483647, %v181
    %vm396 = vcmp.le.f32.partialorder %v395, 0.7853982
    %vm397 = vcmp.lt.s32.totalorder %v181, 0
    %v398 = vand.u32 %v181, 2139095040
    %v399 = vshrl.u32 %v398, 23
    %v400 = vsub.s32 %v399, 127
    %v401 = vand.u32 2147483647, %v181
    %v402 = vand.u32 %v401, 8388607
    %v403 = vor.u32 %v402, 8388608
    %v404 = vsub.s32 0, %v403
    %v405 = vadd.s32 %v400, 1
    %vm406 = vcmp.gt.s32.totalorder %v405, 0
    %v407 = vsel %vm406, %v405, 0
    %v408 = vshrl.u32 %v407, 5
    %v409 = vand.u32 %v407, 31
    %v410 = vsub.s32 32, %v409
    %v411 = vshrl.u32 683565275, %v410
    %v412 = vshll.u32 683565275, %v409
    %v413 = vshrl.u32 2475754826, %v410
    %v414 = vor.u32 %v412, %v413
    %v415 = vshll.u32 2475754826, %v409
    %v416 = vshrl.u32 2131351028, %v410
    %v417 = vor.u32 %v415, %v416
    %v418 = vshll.u32 2131351028, %v409
    %v419 = vshrl.u32 2102212464, %v410
    %v420 = vor.u32 %v418, %v419
    %v421 = vshll.u32 2102212464, %v409
    %v422 = vshrl.u32 920167782, %v410
    %v423 = vor.u32 %v421, %v422
    %v424 = vshll.u32 920167782, %v409
    %v425 = vshrl.u32 1326507024, %v410
    %v426 = vor.u32 %v424, %v425
    %vm427 = vcmp.lt.s32.totalorder %v408, 1
    %vm428 = vcmp.lt.s32.totalorder %v408, 2
    %vm429 = vcmp.lt.s32.totalorder %v408, 3
    %vm430 = vcmp.lt.s32.totalorder %v408, 4
    %v431 = vsel %vm427, %v411, %v414
    %v432 = vsel %vm430, %v420, 2102212464
    %v433 = vsel %vm429, %v417, %v432
    %v434 = vsel %vm428, %v431, %v433
    %v435 = vsel %vm427, %v414, %v417
    %v436 = vsel %vm430, %v423, 920167782
    %v437 = vsel %vm429, %v420, %v436
    %v438 = vsel %vm428, %v435, %v437
    %v439 = vsel %vm427, %v417, %v420
    %v440 = vsel %vm430, %v426, 1326507024
    %v441 = vsel %vm429, %v423, %v440
    %v442 = vsel %vm428, %v439, %v441
    %v443 = vshll.u32 %v403, 8
    %v444 = vmul.u32.u64.compose %v443, %v442
    %v445 = vextract.low.u32 %v444
    %v446 = vextract.high.u32 %v444
    %v447 = vmul.u32.u64.compose %v443, %v438
    %v448 = vextract.low.u32 %v447
    %v449 = vextract.high.u32 %v447
    %v450 = vmul.u32 %v443, %v434
    %v451 = vadd.s32 %v446, %v448
    %vm452 = vc.u32 %v446, %v448
    %v453 = vadd.s32 %v449, 1
    %v454 = vsel %vm452, %v453, %v449
    %v455 = vadd.s32 %v450, %v454
    %v456 = vadd.s32 %v455, 536870912
    %v457 = vshrl.u32 %v456, 30
    %v458 = vshll.u32 %v457, 30
    %v459 = vsub.s32 %v455, %v458
    %vm460 = vcmp.lt.s32.totalorder %v459, 0
    %v461 = vsub.s32 0, %v459
    %v462 = vsel %vm460, %v461, %v459
    %v463 = vclz %v462
    %v464 = vsub.s32 %v463, 2
    %vm465 = vcmp.gt.s32.totalorder 0, %v464
    %v466 = vsel %vm465, 0, %v464
    %v467 = vsub.s32 32, %v466
    %v468 = vshll.u32 %v459, %v466
    %v469 = vshrl.u32 %v451, %v467
    %v470 = vor.u32 %v468, %v469
    %v471 = vsub.s32 4294967266, %v466
    %v472 = vadd.s32 %v471, 127
    %v473 = vshll.u32 %v472, 23
    %v474 = vor.u32 4788187, %v473
    %v475 = vand.u32 2147483647, %v474
    %v477 = vcvt.s32.f32 %v470
    %v478 = vmul.f32 %v477, %v475
    %v479 = vxor.u32 %v478, 2147483648
    %v480 = vsel %vm397, %v479, %v478
    %v481 = vsub.s32 4, %v457
    %v482 = vsel %vm397, %v481, %v457
    %v483 = vsel %vm396, %v181, %v480
    %v484 = vsel %vm396, 0, %v482
    %v485 = vcosq.f32.pop %v483
    %v486 = vsinq.f32.pop %v483
    %vm487 = vweird.f32 %v181
    %v488 = vadd.s32 %v484, 3
    %v489 = vand.u32 %v488, 3
    %vm490 = vcmp.lt.s32.totalorder %v489, 2
    %vm491 = vcmp.eq.s32.totalorder %v489, 0
    %v492 = vxor.u32 %v486, 2147483648
    %v493 = vsel %vm491, %v485, %v492
    %vm494 = vcmp.eq.s32.totalorder %v489, 2
    %v495 = vxor.u32 %v485, 2147483648
    %v496 = vsel %vm494, %v495, %v486
    %v497 = vsel %vm490, %v493, %v496
    %v498 = vsel %vm487, nan, %v497
    %v499 = vand.u32 2147483647, %v182
    %vm500 = vcmp.le.f32.partialorder %v499, 0.7853982
    %vm501 = vcmp.lt.s32.totalorder %v182, 0
    %v502 = vand.u32 %v182, 2139095040
    %v503 = vshrl.u32 %v502, 23
    %v504 = vsub.s32 %v503, 127
    %v505 = vand.u32 2147483647, %v182
    %v506 = vand.u32 %v505, 8388607
    %v507 = vor.u32 %v506, 8388608
    %v508 = vsub.s32 0, %v507
    %v509 = vadd.s32 %v504, 1
    %vm510 = vcmp.gt.s32.totalorder %v509, 0
    %v511 = vsel %vm510, %v509, 0
    %v512 = vshrl.u32 %v511, 5
    %v513 = vand.u32 %v511, 31
    %v514 = vsub.s32 32, %v513
    %v515 = vshrl.u32 683565275, %v514
    %v516 = vshll.u32 683565275, %v513
    %v517 = vshrl.u32 2475754826, %v514
    %v518 = vor.u32 %v516, %v517
    %v519 = vshll.u32 2475754826, %v513
    %v520 = vshrl.u32 2131351028, %v514
    %v521 = vor.u32 %v519, %v520
    %v522 = vshll.u32 2131351028, %v513
    %v523 = vshrl.u32 2102212464, %v514
    %v524 = vor.u32 %v522, %v523
    %v525 = vshll.u32 2102212464, %v513
    %v526 = vshrl.u32 920167782, %v514
    %v527 = vor.u32 %v525, %v526
    %v528 = vshll.u32 920167782, %v513
    %v529 = vshrl.u32 1326507024, %v514
    %v530 = vor.u32 %v528, %v529
    %vm531 = vcmp.lt.s32.totalorder %v512, 1
    %vm532 = vcmp.lt.s32.totalorder %v512, 2
    %vm533 = vcmp.lt.s32.totalorder %v512, 3
    %vm534 = vcmp.lt.s32.totalorder %v512, 4
    %v535 = vsel %vm531, %v515, %v518
    %v536 = vsel %vm534, %v524, 2102212464
    %v537 = vsel %vm533, %v521, %v536
    %v538 = vsel %vm532, %v535, %v537
    %v539 = vsel %vm531, %v518, %v521
    %v540 = vsel %vm534, %v527, 920167782
    %v541 = vsel %vm533, %v524, %v540
    %v542 = vsel %vm532, %v539, %v541
    %v543 = vsel %vm531, %v521, %v524
    %v544 = vsel %vm534, %v530, 1326507024
    %v545 = vsel %vm533, %v527, %v544
    %v546 = vsel %vm532, %v543, %v545
    %v547 = vshll.u32 %v507, 8
    %v548 = vmul.u32.u64.compose %v547, %v546
    %v549 = vextract.low.u32 %v548
    %v550 = vextract.high.u32 %v548
    %v551 = vmul.u32.u64.compose %v547, %v542
    %v552 = vextract.low.u32 %v551
    %v553 = vextract.high.u32 %v551
    %v554 = vmul.u32 %v547, %v538
    %v555 = vadd.s32 %v550, %v552
    %vm556 = vc.u32 %v550, %v552
    %v557 = vadd.s32 %v553, 1
    %v558 = vsel %vm556, %v557, %v553
    %v559 = vadd.s32 %v554, %v558
    %v560 = vadd.s32 %v559, 536870912
    %v561 = vshrl.u32 %v560, 30
    %v562 = vshll.u32 %v561, 30
    %v563 = vsub.s32 %v559, %v562
    %vm564 = vcmp.lt.s32.totalorder %v563, 0
    %v565 = vsub.s32 0, %v563
    %v566 = vsel %vm564, %v565, %v563
    %v567 = vclz %v566
    %v568 = vsub.s32 %v567, 2
    %vm569 = vcmp.gt.s32.totalorder 0, %v568
    %v570 = vsel %vm569, 0, %v568
    %v571 = vsub.s32 32, %v570
    %v572 = vshll.u32 %v563, %v570
    %v573 = vshrl.u32 %v555, %v571
    %v574 = vor.u32 %v572, %v573
    %v575 = vsub.s32 4294967266, %v570
    %v576 = vadd.s32 %v575, 127
    %v577 = vshll.u32 %v576, 23
    %v578 = vor.u32 4788187, %v577
    %v579 = vand.u32 2147483647, %v578
    %v581 = vcvt.s32.f32 %v574
    %v582 = vmul.f32 %v581, %v579
    %v583 = vxor.u32 %v582, 2147483648
    %v584 = vsel %vm501, %v583, %v582
    %v585 = vsub.s32 4, %v561
    %v586 = vsel %vm501, %v585, %v561
    %v587 = vsel %vm500, %v182, %v584
    %v588 = vsel %vm500, 0, %v586
    %v589 = vcosq.f32.pop %v587
    %v590 = vsinq.f32.pop %v587
    %vm591 = vweird.f32 %v182
    %v592 = vadd.s32 %v588, 3
    %v593 = vand.u32 %v592, 3
    %vm594 = vcmp.lt.s32.totalorder %v593, 2
    %vm595 = vcmp.eq.s32.totalorder %v593, 0
    %v596 = vxor.u32 %v590, 2147483648
    %v597 = vsel %vm595, %v589, %v596
    %vm598 = vcmp.eq.s32.totalorder %v593, 2
    %v599 = vxor.u32 %v589, 2147483648
    %v600 = vsel %vm598, %v599, %v590
    %v601 = vsel %vm594, %v597, %v600
    %v602 = vsel %vm591, nan, %v601
    %v603 = vand.u32 2147483647, %v183
    %vm604 = vcmp.le.f32.partialorder %v603, 0.7853982
    %vm605 = vcmp.lt.s32.totalorder %v183, 0
    %v606 = vand.u32 %v183, 2139095040
    %v607 = vshrl.u32 %v606, 23
    %v608 = vsub.s32 %v607, 127
    %v609 = vand.u32 2147483647, %v183
    %v610 = vand.u32 %v609, 8388607
    %v611 = vor.u32 %v610, 8388608
    %v612 = vsub.s32 0, %v611
    %v613 = vadd.s32 %v608, 1
    %vm614 = vcmp.gt.s32.totalorder %v613, 0
    %v615 = vsel %vm614, %v613, 0
    %v616 = vshrl.u32 %v615, 5
    %v617 = vand.u32 %v615, 31
    %v618 = vsub.s32 32, %v617
    %v619 = vshrl.u32 683565275, %v618
    %v620 = vshll.u32 683565275, %v617
    %v621 = vshrl.u32 2475754826, %v618
    %v622 = vor.u32 %v620, %v621
    %v623 = vshll.u32 2475754826, %v617
    %v624 = vshrl.u32 2131351028, %v618
    %v625 = vor.u32 %v623, %v624
    %v626 = vshll.u32 2131351028, %v617
    %v627 = vshrl.u32 2102212464, %v618
    %v628 = vor.u32 %v626, %v627
    %v629 = vshll.u32 2102212464, %v617
    %v630 = vshrl.u32 920167782, %v618
    %v631 = vor.u32 %v629, %v630
    %v632 = vshll.u32 920167782, %v617
    %v633 = vshrl.u32 1326507024, %v618
    %v634 = vor.u32 %v632, %v633
    %vm635 = vcmp.lt.s32.totalorder %v616, 1
    %vm636 = vcmp.lt.s32.totalorder %v616, 2
    %vm637 = vcmp.lt.s32.totalorder %v616, 3
    %vm638 = vcmp.lt.s32.totalorder %v616, 4
    %v639 = vsel %vm635, %v619, %v622
    %v640 = vsel %vm638, %v628, 2102212464
    %v641 = vsel %vm637, %v625, %v640
    %v642 = vsel %vm636, %v639, %v641
    %v643 = vsel %vm635, %v622, %v625
    %v644 = vsel %vm638, %v631, 920167782
    %v645 = vsel %vm637, %v628, %v644
    %v646 = vsel %vm636, %v643, %v645
    %v647 = vsel %vm635, %v625, %v628
    %v648 = vsel %vm638, %v634, 1326507024
    %v649 = vsel %vm637, %v631, %v648
    %v650 = vsel %vm636, %v647, %v649
    %v651 = vshll.u32 %v611, 8
    %v652 = vmul.u32.u64.compose %v651, %v650
    %v653 = vextract.low.u32 %v652
    %v654 = vextract.high.u32 %v652
    %v655 = vmul.u32.u64.compose %v651, %v646
    %v656 = vextract.low.u32 %v655
    %v657 = vextract.high.u32 %v655
    %v658 = vmul.u32 %v651, %v642
    %v659 = vadd.s32 %v654, %v656
    %vm660 = vc.u32 %v654, %v656
    %v661 = vadd.s32 %v657, 1
    %v662 = vsel %vm660, %v661, %v657
    %v663 = vadd.s32 %v658, %v662
    %v664 = vadd.s32 %v663, 536870912
    %v665 = vshrl.u32 %v664, 30
    %v666 = vshll.u32 %v665, 30
    %v667 = vsub.s32 %v663, %v666
    %vm668 = vcmp.lt.s32.totalorder %v667, 0
    %v669 = vsub.s32 0, %v667
    %v670 = vsel %vm668, %v669, %v667
    %v671 = vclz %v670
    %v672 = vsub.s32 %v671, 2
    %vm673 = vcmp.gt.s32.totalorder 0, %v672
    %v674 = vsel %vm673, 0, %v672
    %v675 = vsub.s32 32, %v674
    %v676 = vshll.u32 %v667, %v674
    %v677 = vshrl.u32 %v659, %v675
    %v678 = vor.u32 %v676, %v677
    %v679 = vsub.s32 4294967266, %v674
    %v680 = vadd.s32 %v679, 127
    %v681 = vshll.u32 %v680, 23
    %v682 = vor.u32 4788187, %v681
    %v683 = vand.u32 2147483647, %v682
    %v685 = vcvt.s32.f32 %v678
    %v686 = vmul.f32 %v685, %v683
    %v687 = vxor.u32 %v686, 2147483648
    %v688 = vsel %vm605, %v687, %v686
    %v689 = vsub.s32 4, %v665
    %v690 = vsel %vm605, %v689, %v665
    %v691 = vsel %vm604, %v183, %v688
    %v692 = vsel %vm604, 0, %v690
    %v693 = vcosq.f32.pop %v691
    %v694 = vsinq.f32.pop %v691
    %vm695 = vweird.f32 %v183
    %v696 = vadd.s32 %v692, 3
    %v697 = vand.u32 %v696, 3
    %vm698 = vcmp.lt.s32.totalorder %v697, 2
    %vm699 = vcmp.eq.s32.totalorder %v697, 0
    %v700 = vxor.u32 %v694, 2147483648
    %v701 = vsel %vm699, %v693, %v700
    %vm702 = vcmp.eq.s32.totalorder %v697, 2
    %v703 = vxor.u32 %v693, 2147483648
    %v704 = vsel %vm702, %v703, %v694
    %v705 = vsel %vm698, %v701, %v704
    %v706 = vsel %vm695, nan, %v705
    %v707 = vand.u32 2147483647, %v184
    %vm708 = vcmp.le.f32.partialorder %v707, 0.7853982
    %vm709 = vcmp.lt.s32.totalorder %v184, 0
    %v710 = vand.u32 %v184, 2139095040
    %v711 = vshrl.u32 %v710, 23
    %v712 = vsub.s32 %v711, 127
    %v713 = vand.u32 2147483647, %v184
    %v714 = vand.u32 %v713, 8388607
    %v715 = vor.u32 %v714, 8388608
    %v716 = vsub.s32 0, %v715
    %v717 = vadd.s32 %v712, 1
    %vm718 = vcmp.gt.s32.totalorder %v717, 0
    %v719 = vsel %vm718, %v717, 0
    %v720 = vshrl.u32 %v719, 5
    %v721 = vand.u32 %v719, 31
    %v722 = vsub.s32 32, %v721
    %v723 = vshrl.u32 683565275, %v722
    %v724 = vshll.u32 683565275, %v721
    %v725 = vshrl.u32 2475754826, %v722
    %v726 = vor.u32 %v724, %v725
    %v727 = vshll.u32 2475754826, %v721
    %v728 = vshrl.u32 2131351028, %v722
    %v729 = vor.u32 %v727, %v728
    %v730 = vshll.u32 2131351028, %v721
    %v731 = vshrl.u32 2102212464, %v722
    %v732 = vor.u32 %v730, %v731
    %v733 = vshll.u32 2102212464, %v721
    %v734 = vshrl.u32 920167782, %v722
    %v735 = vor.u32 %v733, %v734
    %v736 = vshll.u32 920167782, %v721
    %v737 = vshrl.u32 1326507024, %v722
    %v738 = vor.u32 %v736, %v737
    %vm739 = vcmp.lt.s32.totalorder %v720, 1
    %vm740 = vcmp.lt.s32.totalorder %v720, 2
    %vm741 = vcmp.lt.s32.totalorder %v720, 3
    %vm742 = vcmp.lt.s32.totalorder %v720, 4
    %v743 = vsel %vm739, %v723, %v726
    %v744 = vsel %vm742, %v732, 2102212464
    %v745 = vsel %vm741, %v729, %v744
    %v746 = vsel %vm740, %v743, %v745
    %v747 = vsel %vm739, %v726, %v729
    %v748 = vsel %vm742, %v735, 920167782
    %v749 = vsel %vm741, %v732, %v748
    %v750 = vsel %vm740, %v747, %v749
    %v751 = vsel %vm739, %v729, %v732
    %v752 = vsel %vm742, %v738, 1326507024
    %v753 = vsel %vm741, %v735, %v752
    %v754 = vsel %vm740, %v751, %v753
    %v755 = vshll.u32 %v715, 8
    %v756 = vmul.u32.u64.compose %v755, %v754
    %v757 = vextract.low.u32 %v756
    %v758 = vextract.high.u32 %v756
    %v759 = vmul.u32.u64.compose %v755, %v750
    %v760 = vextract.low.u32 %v759
    %v761 = vextract.high.u32 %v759
    %v762 = vmul.u32 %v755, %v746
    %v763 = vadd.s32 %v758, %v760
    %vm764 = vc.u32 %v758, %v760
    %v765 = vadd.s32 %v761, 1
    %v766 = vsel %vm764, %v765, %v761
    %v767 = vadd.s32 %v762, %v766
    %v768 = vadd.s32 %v767, 536870912
    %v769 = vshrl.u32 %v768, 30
    %v770 = vshll.u32 %v769, 30
    %v771 = vsub.s32 %v767, %v770
    %vm772 = vcmp.lt.s32.totalorder %v771, 0
    %v773 = vsub.s32 0, %v771
    %v774 = vsel %vm772, %v773, %v771
    %v775 = vclz %v774
    %v776 = vsub.s32 %v775, 2
    %vm777 = vcmp.gt.s32.totalorder 0, %v776
    %v778 = vsel %vm777, 0, %v776
    %v779 = vsub.s32 32, %v778
    %v780 = vshll.u32 %v771, %v778
    %v781 = vshrl.u32 %v763, %v779
    %v782 = vor.u32 %v780, %v781
    %v783 = vsub.s32 4294967266, %v778
    %v784 = vadd.s32 %v783, 127
    %v785 = vshll.u32 %v784, 23
    %v786 = vor.u32 4788187, %v785
    %v787 = vand.u32 2147483647, %v786
    %v789 = vcvt.s32.f32 %v782
    %v790 = vmul.f32 %v789, %v787
    %v791 = vxor.u32 %v790, 2147483648
    %v792 = vsel %vm709, %v791, %v790
    %v793 = vsub.s32 4, %v769
    %v794 = vsel %vm709, %v793, %v769
    %v795 = vsel %vm708, %v184, %v792
    %v796 = vsel %vm708, 0, %v794
    %v797 = vcosq.f32.pop %v795
    %v798 = vsinq.f32.pop %v795
    %vm799 = vweird.f32 %v184
    %v800 = vadd.s32 %v796, 3
    %v801 = vand.u32 %v800, 3
    %vm802 = vcmp.lt.s32.totalorder %v801, 2
    %vm803 = vcmp.eq.s32.totalorder %v801, 0
    %v804 = vxor.u32 %v798, 2147483648
    %v805 = vsel %vm803, %v797, %v804
    %vm806 = vcmp.eq.s32.totalorder %v801, 2
    %v807 = vxor.u32 %v797, 2147483648
    %v808 = vsel %vm806, %v807, %v798
    %v809 = vsel %vm802, %v805, %v808
    %v810 = vsel %vm799, nan, %v809
    %v811 = vand.u32 2147483647, %v185
    %vm812 = vcmp.le.f32.partialorder %v811, 0.7853982
    %vm813 = vcmp.lt.s32.totalorder %v185, 0
    %v814 = vand.u32 %v185, 2139095040
    %v815 = vshrl.u32 %v814, 23
    %v816 = vsub.s32 %v815, 127
    %v817 = vand.u32 2147483647, %v185
    %v818 = vand.u32 %v817, 8388607
    %v819 = vor.u32 %v818, 8388608
    %v820 = vsub.s32 0, %v819
    %v821 = vadd.s32 %v816, 1
    %vm822 = vcmp.gt.s32.totalorder %v821, 0
    %v823 = vsel %vm822, %v821, 0
    %v824 = vshrl.u32 %v823, 5
    %v825 = vand.u32 %v823, 31
    %v826 = vsub.s32 32, %v825
    %v827 = vshrl.u32 683565275, %v826
    %v828 = vshll.u32 683565275, %v825
    %v829 = vshrl.u32 2475754826, %v826
    %v830 = vor.u32 %v828, %v829
    %v831 = vshll.u32 2475754826, %v825
    %v832 = vshrl.u32 2131351028, %v826
    %v833 = vor.u32 %v831, %v832
    %v834 = vshll.u32 2131351028, %v825
    %v835 = vshrl.u32 2102212464, %v826
    %v836 = vor.u32 %v834, %v835
    %v837 = vshll.u32 2102212464, %v825
    %v838 = vshrl.u32 920167782, %v826
    %v839 = vor.u32 %v837, %v838
    %v840 = vshll.u32 920167782, %v825
    %v841 = vshrl.u32 1326507024, %v826
    %v842 = vor.u32 %v840, %v841
    %vm843 = vcmp.lt.s32.totalorder %v824, 1
    %vm844 = vcmp.lt.s32.totalorder %v824, 2
    %vm845 = vcmp.lt.s32.totalorder %v824, 3
    %vm846 = vcmp.lt.s32.totalorder %v824, 4
    %v847 = vsel %vm843, %v827, %v830
    %v848 = vsel %vm846, %v836, 2102212464
    %v849 = vsel %vm845, %v833, %v848
    %v850 = vsel %vm844, %v847, %v849
    %v851 = vsel %vm843, %v830, %v833
    %v852 = vsel %vm846, %v839, 920167782
    %v853 = vsel %vm845, %v836, %v852
    %v854 = vsel %vm844, %v851, %v853
    %v855 = vsel %vm843, %v833, %v836
    %v856 = vsel %vm846, %v842, 1326507024
    %v857 = vsel %vm845, %v839, %v856
    %v858 = vsel %vm844, %v855, %v857
    %v859 = vshll.u32 %v819, 8
    %v860 = vmul.u32.u64.compose %v859, %v858
    %v861 = vextract.low.u32 %v860
    %v862 = vextract.high.u32 %v860
    %v863 = vmul.u32.u64.compose %v859, %v854
    %v864 = vextract.low.u32 %v863
    %v865 = vextract.high.u32 %v863
    %v866 = vmul.u32 %v859, %v850
    %v867 = vadd.s32 %v862, %v864
    %vm868 = vc.u32 %v862, %v864
    %v869 = vadd.s32 %v865, 1
    %v870 = vsel %vm868, %v869, %v865
    %v871 = vadd.s32 %v866, %v870
    %v872 = vadd.s32 %v871, 536870912
    %v873 = vshrl.u32 %v872, 30
    %v874 = vshll.u32 %v873, 30
    %v875 = vsub.s32 %v871, %v874
    %vm876 = vcmp.lt.s32.totalorder %v875, 0
    %v877 = vsub.s32 0, %v875
    %v878 = vsel %vm876, %v877, %v875
    %v879 = vclz %v878
    %v880 = vsub.s32 %v879, 2
    %vm881 = vcmp.gt.s32.totalorder 0, %v880
    %v882 = vsel %vm881, 0, %v880
    %v883 = vsub.s32 32, %v882
    %v884 = vshll.u32 %v875, %v882
    %v885 = vshrl.u32 %v867, %v883
    %v886 = vor.u32 %v884, %v885
    %v887 = vsub.s32 4294967266, %v882
    %v888 = vadd.s32 %v887, 127
    %v889 = vshll.u32 %v888, 23
    %v890 = vor.u32 4788187, %v889
    %v891 = vand.u32 2147483647, %v890
    %v893 = vcvt.s32.f32 %v886
    %v894 = vmul.f32 %v893, %v891
    %v895 = vxor.u32 %v894, 2147483648
    %v896 = vsel %vm813, %v895, %v894
    %v897 = vsub.s32 4, %v873
    %v898 = vsel %vm813, %v897, %v873
    %v899 = vsel %vm812, %v185, %v896
    %v900 = vsel %vm812, 0, %v898
    %v901 = vcosq.f32.pop %v899
    %v902 = vsinq.f32.pop %v899
    %vm903 = vweird.f32 %v185
    %v904 = vadd.s32 %v900, 3
    %v905 = vand.u32 %v904, 3
    %vm906 = vcmp.lt.s32.totalorder %v905, 2
    %vm907 = vcmp.eq.s32.totalorder %v905, 0
    %v908 = vxor.u32 %v902, 2147483648
    %v909 = vsel %vm907, %v901, %v908
    %vm910 = vcmp.eq.s32.totalorder %v905, 2
    %v911 = vxor.u32 %v901, 2147483648
    %v912 = vsel %vm910, %v911, %v902
    %v913 = vsel %vm906, %v909, %v912
    %v914 = vsel %vm903, nan, %v913
    %v915 = vand.u32 2147483647, %v186
    %vm916 = vcmp.le.f32.partialorder %v915, 0.7853982
    %vm917 = vcmp.lt.s32.totalorder %v186, 0
    %v918 = vand.u32 %v186, 2139095040
    %v919 = vshrl.u32 %v918, 23
    %v920 = vsub.s32 %v919, 127
    %v921 = vand.u32 2147483647, %v186
    %v922 = vand.u32 %v921, 8388607
    %v923 = vor.u32 %v922, 8388608
    %v924 = vsub.s32 0, %v923
    %v925 = vadd.s32 %v920, 1
    %vm926 = vcmp.gt.s32.totalorder %v925, 0
    %v927 = vsel %vm926, %v925, 0
    %v928 = vshrl.u32 %v927, 5
    %v929 = vand.u32 %v927, 31
    %v930 = vsub.s32 32, %v929
    %v931 = vshrl.u32 683565275, %v930
    %v932 = vshll.u32 683565275, %v929
    %v933 = vshrl.u32 2475754826, %v930
    %v934 = vor.u32 %v932, %v933
    %v935 = vshll.u32 2475754826, %v929
    %v936 = vshrl.u32 2131351028, %v930
    %v937 = vor.u32 %v935, %v936
    %v938 = vshll.u32 2131351028, %v929
    %v939 = vshrl.u32 2102212464, %v930
    %v940 = vor.u32 %v938, %v939
    %v941 = vshll.u32 2102212464, %v929
    %v942 = vshrl.u32 920167782, %v930
    %v943 = vor.u32 %v941, %v942
    %v944 = vshll.u32 920167782, %v929
    %v945 = vshrl.u32 1326507024, %v930
    %v946 = vor.u32 %v944, %v945
    %vm947 = vcmp.lt.s32.totalorder %v928, 1
    %vm948 = vcmp.lt.s32.totalorder %v928, 2
    %vm949 = vcmp.lt.s32.totalorder %v928, 3
    %vm950 = vcmp.lt.s32.totalorder %v928, 4
    %v951 = vsel %vm947, %v931, %v934
    %v952 = vsel %vm950, %v940, 2102212464
    %v953 = vsel %vm949, %v937, %v952
    %v954 = vsel %vm948, %v951, %v953
    %v955 = vsel %vm947, %v934, %v937
    %v956 = vsel %vm950, %v943, 920167782
    %v957 = vsel %vm949, %v940, %v956
    %v958 = vsel %vm948, %v955, %v957
    %v959 = vsel %vm947, %v937, %v940
    %v960 = vsel %vm950, %v946, 1326507024
    %v961 = vsel %vm949, %v943, %v960
    %v962 = vsel %vm948, %v959, %v961
    %v963 = vshll.u32 %v923, 8
    %v964 = vmul.u32.u64.compose %v963, %v962
    %v965 = vextract.low.u32 %v964
    %v966 = vextract.high.u32 %v964
    %v967 = vmul.u32.u64.compose %v963, %v958
    %v968 = vextract.low.u32 %v967
    %v969 = vextract.high.u32 %v967
    %v970 = vmul.u32 %v963, %v954
    %v971 = vadd.s32 %v966, %v968
    %vm972 = vc.u32 %v966, %v968
    %v973 = vadd.s32 %v969, 1
    %v974 = vsel %vm972, %v973, %v969
    %v975 = vadd.s32 %v970, %v974
    %v976 = vadd.s32 %v975, 536870912
    %v977 = vshrl.u32 %v976, 30
    %v978 = vshll.u32 %v977, 30
    %v979 = vsub.s32 %v975, %v978
    %vm980 = vcmp.lt.s32.totalorder %v979, 0
    %v981 = vsub.s32 0, %v979
    %v982 = vsel %vm980, %v981, %v979
    %v983 = vclz %v982
    %v984 = vsub.s32 %v983, 2
    %vm985 = vcmp.gt.s32.totalorder 0, %v984
    %v986 = vsel %vm985, 0, %v984
    %v987 = vsub.s32 32, %v986
    %v988 = vshll.u32 %v979, %v986
    %v989 = vshrl.u32 %v971, %v987
    %v990 = vor.u32 %v988, %v989
    %v991 = vsub.s32 4294967266, %v986
    %v992 = vadd.s32 %v991, 127
    %v993 = vshll.u32 %v992, 23
    %v994 = vor.u32 4788187, %v993
    %v995 = vand.u32 2147483647, %v994
    %v997 = vcvt.s32.f32 %v990
    %v998 = vmul.f32 %v997, %v995
    %v999 = vxor.u32 %v998, 2147483648
    %v1000 = vsel %vm917, %v999, %v998
    %v1001 = vsub.s32 4, %v977
    %v1002 = vsel %vm917, %v1001, %v977
    %v1003 = vsel %vm916, %v186, %v1000
    %v1004 = vsel %vm916, 0, %v1002
    %v1005 = vcosq.f32.pop %v1003
    %v1006 = vsinq.f32.pop %v1003
    %vm1007 = vweird.f32 %v186
    %v1008 = vadd.s32 %v1004, 3
    %v1009 = vand.u32 %v1008, 3
    %vm1010 = vcmp.lt.s32.totalorder %v1009, 2
    %vm1011 = vcmp.eq.s32.totalorder %v1009, 0
    %v1012 = vxor.u32 %v1006, 2147483648
    %v1013 = vsel %vm1011, %v1005, %v1012
    %vm1014 = vcmp.eq.s32.totalorder %v1009, 2
    %v1015 = vxor.u32 %v1005, 2147483648
    %v1016 = vsel %vm1014, %v1015, %v1006
    %v1017 = vsel %vm1010, %v1013, %v1016
    %v1018 = vsel %vm1007, nan, %v1017
    %1019 = vst [vmem:[#allocation7] sm:$0xff] %v290
    %1020 = vst [vmem:[#allocation7 + $0x8] sm:$0xff] %v394
    %1021 = vst [vmem:[#allocation7 + $0x10] sm:$0xff] %v498
    %1022 = vst [vmem:[#allocation7 + $0x18] sm:$0xff] %v602
    %1023 = vst [vmem:[#allocation7 + $0x20] sm:$0xff] %v706
    %1024 = vst [vmem:[#allocation7 + $0x28] sm:$0xff] %v810
    %1025 = vst [vmem:[#allocation7 + $0x30] sm:$0xff] %v914
    %1026 = vst [vmem:[#allocation7 + $0x38] sm:$0xff] %v1018
    // Predicated region
    $region22: #{tpu_custom_call.1} parent=1 // pred_check
      _
    $region23: #{tpu_custom_call.1} parent=1 // pred_check_branch
      %1028 = sbr.rel (0) target = $region25
    $region24: #{tpu_custom_call.1} parent=1 // pred_region
      %s1030 = ssub.s32 1024, 1024
      %1031 = vsyncadd [#allocation4], %s1030
      %s1032 = sshll.u32 [#allocation7], 4
      %s1033 = int_to_ptr.vmem [resolvable:$true] %s1032
      %1038 = dma.vmem_to_hbm [thread:$0]  %s1033, 1024, %s3, [#allocation4], 128, 128, 8
    $region25: #{tpu_custom_call.1} parent=1 // pred_fallthru
      _
    // Predicated region
    $region26: #{tpu_custom_call.1} parent=1 // pred_check
      _
    $region27: #{tpu_custom_call.1} parent=1 // pred_check_branch
      %1040 = sbr.rel (0) target = $region29
    $region28: #{tpu_custom_call.1} parent=1 // pred_region
      %1041 = dma.done [#allocation4], 1024
    $region29: #{tpu_custom_call.1} parent=1 // pred_fallthru
      _
    %1042 = vsyncpa [#allocation3], 1
    %1043 = vsyncpa [#allocation6], 1
    %1044 = vsyncpa [#allocation4], 1

</llo_original>
